<compile_context>
chip_gen: v7x
topology: tpu7x:2x2x1
jax: 0.10.0
libtpu: 0.0.40
codegen_flags: <defaults>
</compile_context>

<pallas_src>
import jax
import jax.numpy as jnp
from jax.experimental import pallas as pl
from jax.experimental.pallas import tpu as pltpu

IN_F = 4          # fc1 in-features
IN_PAD = 8        # padded so fc1 is a clean K=8 MXU pass
HIDDEN = 100      # fc1/fc2 width
OUT_F = 3         # fc3 out-features
H_PAD = 128       # hidden padded to one full lane register
O_PAD = 128       # logits kept lane-dense for compute
O_STORE = 8       # only these lanes hit HBM (3 classes + 5 zeros)
NEG_BIAS = -1e30  # bias for padded logit lanes: exp underflows to exactly 0

TB_MAX = 2048     # rows per grid step; ~<8 MiB live VMEM @ f32, fits every gen


def mlp_kernel(x_ref, w1_ref, b1_ref, w23_ref, b23_ref, o_ref):
    """One batch tile: relu(x @ W1 + b1) @ W23 + b23, row softmax, narrow store."""
    # fc1 on the MXU (K padded to 8); bias + ReLU on the VPU.
    h = jnp.dot(x_ref[...], w1_ref[...], preferred_element_type=jnp.float32)
    h = jnp.maximum(h + b1_ref[...], 0.0)            # (TB, 128); padded lanes stay 0

    # folded fc2*fc3 on the MXU (exact: no activation between fc2 and fc3)
    logits = jnp.dot(h, w23_ref[...], preferred_element_type=jnp.float32)
    logits = logits + b23_ref[...]                   # (TB, 128); pad lanes ~= -1e30

    # numerically-stable softmax over lanes; padded lanes contribute exactly 0
    m = jnp.max(logits, axis=1, keepdims=True)
    e = jnp.exp(logits - m)
    denom = jnp.sum(e, axis=1, keepdims=True)
    probs = e / denom                                # exact normalization

    # narrow HBM writeback: only the first O_STORE lanes are useful
    o_ref[...] = probs[:, :O_STORE].astype(o_ref.dtype)


def prepare_params(params):
    """One-time fold of fc2*fc3 and padding to (8,128)-friendly shapes.
    Hoisted out of the per-call path (perf feedback)."""
    w1, b1, w2, b2, w3, b3 = params                  # (4,100),(1,100),(100,100),(1,100),(100,3),(1,3)
    w23 = w2 @ w3                                    # (100, 3)
    b23 = b2 @ w3 + b3                               # (1, 3)

    w1p = jnp.zeros((IN_PAD, H_PAD), jnp.float32).at[:IN_F, :HIDDEN].set(w1)
    b1p = jnp.zeros((1, H_PAD), jnp.float32).at[:, :HIDDEN].set(b1)
    w23p = jnp.zeros((H_PAD, O_PAD), jnp.float32).at[:HIDDEN, :OUT_F].set(w23)
    b23p = jnp.full((1, O_PAD), NEG_BIAS, jnp.float32).at[:, :OUT_F].set(b23)
    return w1p, b1p, w23p, b23p


def _choose_tile(B):
    """Pick the batch tile: big enough to amortize per-step overhead, small
    enough to fit VMEM, and split so v7x's 2 TensorCores both get work."""
    B8 = -(-B // 8) * 8                              # sublane-aligned upper bound
    if B8 <= TB_MAX:
        tb = B8
        if B8 >= 1024:                               # worth splitting for megacore
            tb = -(-(B8 // 2) // 8) * 8
        return max(8, tb)
    return TB_MAX


def net_forward(x, prepared):
    w1p, b1p, w23p, b23p = prepared
    B = x.shape[0]

    # Pad features 4 -> 8 (16 -> 32 B/row) so fc1 runs as one K=8 MXU matmul.
    xp = jnp.pad(x.astype(jnp.float32), ((0, 0), (0, IN_PAD - IN_F)))

    TB = _choose_tile(B)
    grid = (pl.cdiv(B, TB),)                         # ragged last tile: OOB rows are
                                                     # computed on garbage and masked
                                                     # out on writeback (row-wise ops)
    const = lambda shape: pl.BlockSpec(shape, lambda i: (0, 0))

    out = pl.pallas_call(
        mlp_kernel,
        out_shape=jax.ShapeDtypeStruct((B, O_STORE), jnp.float32),
        grid=grid,
        in_specs=[
            pl.BlockSpec((TB, IN_PAD), lambda i: (i, 0)),   # x: tiled over batch
            const((IN_PAD, H_PAD)),                         # weights/biases: VMEM-resident
            const((1, H_PAD)),
            const((H_PAD, O_PAD)),
            const((1, O_PAD)),
        ],
        out_specs=pl.BlockSpec((TB, O_STORE), lambda i: (i, 0)),
        compiler_params=pltpu.CompilerParams(
            dimension_semantics=("parallel",),              # megacore-shardable batch axis
            vmem_limit_bytes=32 * 1024 * 1024,              # explicit budget (v7x: 64 MiB phys)
        ),
    )(xp, w1p, b1p, w23p, b23p)

    return out[:, :OUT_F]                                   # drop the 5 zero lanes


def net_reference(x, params):
    """Pure-JAX reference matching the PyTorch forward exactly (unfused)."""
    w1, b1, w2, b2, w3, b3 = params
    h = jnp.maximum(x @ w1 + b1, 0.0)
    h = h @ w2 + b2
    logits = h @ w3 + b3
    return jax.nn.softmax(logits, axis=1)


def init_params(key):
    """Deterministic init; shapes match nn.Linear(4,100), (100,100), (100,3).
    Weights stored as (in, out); biases as (1, out)."""
    k1, k2, k3, k4, k5, k6 = jax.random.split(key, 6)
    w1 = jax.random.normal(k1, (4, 100), jnp.float32) * 0.1
    b1 = jax.random.normal(k2, (1, 100), jnp.float32) * 0.1
    w2 = jax.random.normal(k3, (100, 100), jnp.float32) * 0.1
    b2 = jax.random.normal(k4, (1, 100), jnp.float32) * 0.1
    w3 = jax.random.normal(k5, (100, 3), jnp.float32) * 0.1
    b3 = jax.random.normal(k6, (1, 3), jnp.float32) * 0.1
    return (w1, b1, w2, b2, w3, b3)


if __name__ == "__main__":
    key = jax.random.PRNGKey(0)
    pkey, xkey1, xkey2 = jax.random.split(key, 3)
    params = init_params(pkey)
    prepared = jax.tree_util.tree_map(jax.block_until_ready, prepare_params(params))

    fwd = jax.jit(net_forward)

    # 1) iris-style small batch: (batch=2, features=4)
    x_small = jax.random.normal(xkey1, (2, IN_F), jnp.float32)
    out_small = jax.block_until_ready(fwd(x_small, prepared))
    ref_small = net_reference(x_small, params)
    assert out_small.shape == (2, OUT_F)
    assert jnp.allclose(jnp.sum(out_small, axis=1), 1.0, atol=1e-5)
    assert jnp.allclose(out_small, ref_small, atol=1e-4, rtol=1e-4)

    # 2) larger batch exercising a multi-step (ragged) grid
    x_big = jax.random.normal(xkey2, (1201, IN_F), jnp.float32)
    out_big = jax.block_until_ready(fwd(x_big, prepared))
    ref_big = net_reference(x_big, params)
    assert out_big.shape == (1201, OUT_F)
    assert jnp.allclose(jnp.sum(out_big, axis=1), 1.0, atol=1e-5)
    assert jnp.allclose(out_big, ref_big, atol=1e-4, rtol=1e-4)

    print("KERNEL_OK")
</pallas_src>

<mosaic_0001>
module attributes {stable_mosaic.version = 11 : i64} {
  func.func @mlp_kernel(%arg0: i32, %arg1: memref<8x8xf32, #tpu.memory_space<vmem>>, %arg2: memref<8x128xf32, #tpu.memory_space<vmem>>, %arg3: memref<1x128xf32, #tpu.memory_space<vmem>>, %arg4: memref<128x128xf32, #tpu.memory_space<vmem>>, %arg5: memref<1x128xf32, #tpu.memory_space<vmem>>, %arg6: memref<8x8xf32, #tpu.memory_space<vmem>>) attributes {dimension_semantics = [#tpu.dimension_semantics<parallel>], iteration_bounds = array<i64: 1>, scalar_prefetch = 0 : i64, scratch_operands = 0 : i64, tpu.core_type = #tpu.core_type<tc>, window_params = [{transform_indices = @transform_0, window_bounds = array<i64: 8, 8>}, {pipeline_mode = #tpu.pipeline_mode<synchronous>, transform_indices = @transform_1, window_bounds = array<i64: 8, 128>}, {pipeline_mode = #tpu.pipeline_mode<synchronous>, transform_indices = @transform_2, window_bounds = array<i64: 1, 128>}, {pipeline_mode = #tpu.pipeline_mode<synchronous>, transform_indices = @transform_3, window_bounds = array<i64: 128, 128>}, {pipeline_mode = #tpu.pipeline_mode<synchronous>, transform_indices = @transform_4, window_bounds = array<i64: 1, 128>}, {transform_indices = @transform_5, window_bounds = array<i64: 8, 8>}]} {
    %c0 = arith.constant 0 : index
    %c0_0 = arith.constant 0 : index
    %0 = vector.load %arg1[%c0, %c0_0] : memref<8x8xf32, #tpu.memory_space<vmem>>, vector<8x8xf32>
    %c0_1 = arith.constant 0 : index
    %c0_2 = arith.constant 0 : index
    %1 = vector.load %arg2[%c0_1, %c0_2] : memref<8x128xf32, #tpu.memory_space<vmem>>, vector<8x128xf32>
    %cst = arith.constant dense<0.000000e+00> : vector<8x128xf32>
    %2 = tpu.matmul %0, %1, %cst {dimension_numbers = #tpu.dot_dimension_numbers<[1], [0], [0], [1], [0, 0, 1, 1], [], []>} : vector<8x8xf32>, vector<8x128xf32>, vector<8x128xf32> -> vector<8x128xf32>
    %c0_3 = arith.constant 0 : index
    %c0_4 = arith.constant 0 : index
    %3 = vector.load %arg3[%c0_3, %c0_4] : memref<1x128xf32, #tpu.memory_space<vmem>>, vector<1x128xf32>
    %4 = vector.broadcast %3 : vector<1x128xf32> to vector<8x128xf32>
    %5 = arith.addf %2, %4 : vector<8x128xf32>
    %cst_5 = arith.constant 0.000000e+00 : f32
    %6 = vector.broadcast %cst_5 : f32 to vector<8x128xf32>
    %7 = arith.maximumf %5, %6 : vector<8x128xf32>
    %c0_6 = arith.constant 0 : index
    %c0_7 = arith.constant 0 : index
    %8 = vector.load %arg4[%c0_6, %c0_7] : memref<128x128xf32, #tpu.memory_space<vmem>>, vector<128x128xf32>
    %cst_8 = arith.constant dense<0.000000e+00> : vector<8x128xf32>
    %9 = tpu.matmul %7, %8, %cst_8 {dimension_numbers = #tpu.dot_dimension_numbers<[1], [0], [0], [1], [0, 0, 1, 1], [], []>} : vector<8x128xf32>, vector<128x128xf32>, vector<8x128xf32> -> vector<8x128xf32>
    %c0_9 = arith.constant 0 : index
    %c0_10 = arith.constant 0 : index
    %10 = vector.load %arg5[%c0_9, %c0_10] : memref<1x128xf32, #tpu.memory_space<vmem>>, vector<1x128xf32>
    %11 = vector.broadcast %10 : vector<1x128xf32> to vector<8x128xf32>
    %12 = arith.addf %9, %11 : vector<8x128xf32>
    %cst_11 = arith.constant dense<0xFF800000> : vector<8xf32>
    %13 = vector.multi_reduction <maximumf>, %12, %cst_11 [1] : vector<8x128xf32> to vector<8xf32>
    %14 = vector.shape_cast %13 : vector<8xf32> to vector<8x1xf32>
    %15 = vector.broadcast %14 : vector<8x1xf32> to vector<8x128xf32>
    %16 = arith.subf %12, %15 : vector<8x128xf32>
    %17 = math.exp %16 : vector<8x128xf32>
    %cst_12 = arith.constant dense<0.000000e+00> : vector<8xf32>
    %18 = vector.multi_reduction <add>, %17, %cst_12 [1] : vector<8x128xf32> to vector<8xf32>
    %19 = vector.shape_cast %18 : vector<8xf32> to vector<8x1xf32>
    %20 = vector.broadcast %19 : vector<8x1xf32> to vector<8x128xf32>
    %21 = arith.divf %17, %20 : vector<8x128xf32>
    %22 = vector.extract_strided_slice %21 {offsets = [0, 0], sizes = [8, 8], strides = [1, 1]} : vector<8x128xf32> to vector<8x8xf32>
    %c0_13 = arith.constant 0 : index
    %c0_14 = arith.constant 0 : index
    %23 = vector.load %arg6[%c0_13, %c0_14] : memref<8x8xf32, #tpu.memory_space<vmem>>, vector<8x8xf32>
    tpu.vector_store %arg6[%c0_13, %c0_14], %22 {strides = array<i32>} : memref<8x8xf32, #tpu.memory_space<vmem>>, vector<8x8xf32>,
    return
  }
  func.func @transform_0(%arg0: i32) -> (i32, i32) {
    %c0_i32 = arith.constant 0 : i32
    %c0_i32_0 = arith.constant 0 : i32
    return %arg0, %c0_i32 : i32, i32
  }
  func.func @transform_1(%arg0: i32) -> (i32, i32) {
    %c0_i32 = arith.constant 0 : i32
    %c0_i32_0 = arith.constant 0 : i32
    %c0_i32_1 = arith.constant 0 : i32
    return %c0_i32, %c0_i32_0 : i32, i32
  }
  func.func @transform_2(%arg0: i32) -> (i32, i32) {
    %c0_i32 = arith.constant 0 : i32
    %c0_i32_0 = arith.constant 0 : i32
    %c0_i32_1 = arith.constant 0 : i32
    return %c0_i32, %c0_i32_0 : i32, i32
  }
  func.func @transform_3(%arg0: i32) -> (i32, i32) {
    %c0_i32 = arith.constant 0 : i32
    %c0_i32_0 = arith.constant 0 : i32
    %c0_i32_1 = arith.constant 0 : i32
    return %c0_i32, %c0_i32_0 : i32, i32
  }
  func.func @transform_4(%arg0: i32) -> (i32, i32) {
    %c0_i32 = arith.constant 0 : i32
    %c0_i32_0 = arith.constant 0 : i32
    %c0_i32_1 = arith.constant 0 : i32
    return %c0_i32, %c0_i32_0 : i32, i32
  }
  func.func @transform_5(%arg0: i32) -> (i32, i32) {
    %c0_i32 = arith.constant 0 : i32
    %c0_i32_0 = arith.constant 0 : i32
    return %arg0, %c0_i32 : i32, i32
  }
}

</mosaic_0001>

<llo_original>
// kernel: net_forward.1
$region0: #{net_forward.1}
  #allocation0 [shape = 'u32[]', space=smem, size = 0x4, offset = 0x4, fixed_abs, tag = 'smem constant byte address 0x4 - core index']
  #allocation1 [shape = 'u32[144,128]{1,0:T(1,128)}', space=vmem, size = 0x12000, scoped, tag = 'internal scratch']
  %s0 = inlined_call_operand.vmem [shape: f32[2,8], index: 0, kind: input, shape index: {}]
  %s1 = inlined_call_operand.vmem [shape: f32[8,128], index: 1, kind: input, shape index: {}]
  %s2 = inlined_call_operand.vmem [shape: f32[1,128], index: 2, kind: input, shape index: {}]
  %s3 = inlined_call_operand.hbm [shape: f32[128,128], index: 3, kind: input, shape index: {}]
  %s4 = inlined_call_operand.vmem [shape: f32[1,128], index: 4, kind: input, shape index: {}]
  %s5 = inlined_call_operand.hbm [shape: f32[2,8], index: 5, kind: output, shape index: {}]
  %s6 = sld [smem:[#allocation0]]
  $region34: #{net_forward.1} parent=0
    _
  %s8 = ssub.s32 1, %s6
  %s9 = scalar_select 0, %s8, %s6
  $region1: #{net_forward.1} parent=0
    #allocation2 [shape = 'u8[65536]{0}', space=vmem, size = 0x10000, scoped, tag = 'input window, operand 3, single buffered']
    #allocation3 [shape = 's32[1]{0}', space=sflag, size = 0x4, scoped, tag = 'scoped memory for net_forward.1']
    #allocation4 [shape = 's32[1]{0}', space=sflag, size = 0x4, scoped, tag = 'scoped memory for net_forward.1']
    #allocation5 [shape = 'u8[4096]{0}', space=vmem, size = 0x1000, scoped, tag = 'output window, operand 0, single buffered']
    %10 = vsyncpa [#allocation3], 0
    %11 = vsyncpa [#allocation4], 0
    // Predicated region
    $region2: #{net_forward.1} parent=1 // pred_check
      _
    $region3: #{net_forward.1} parent=1 // pred_check_branch
      %13 = sbr.rel (0) target = $region5
    $region4: #{net_forward.1} parent=1 // pred_region
      _
    $region5: #{net_forward.1} parent=1 // pred_fallthru
      _
    // Predicated region
    $region6: #{net_forward.1} parent=1 // pred_check
      _
    $region7: #{net_forward.1} parent=1 // pred_check_branch
      %15 = sbr.rel (0) target = $region9
    $region8: #{net_forward.1} parent=1 // pred_region
      _
    $region9: #{net_forward.1} parent=1 // pred_fallthru
      _
    // Predicated region
    $region10: #{net_forward.1} parent=1 // pred_check
      _
    $region11: #{net_forward.1} parent=1 // pred_check_branch
      %17 = sbr.rel (0) target = $region13
    $region12: #{net_forward.1} parent=1 // pred_region
      _
    $region13: #{net_forward.1} parent=1 // pred_fallthru
      _
    // Predicated region
    $region14: #{net_forward.1} parent=1 // pred_check
      _
    $region15: #{net_forward.1} parent=1 // pred_check_branch
      %19 = sbr.rel (0) target = $region17
    $region16: #{net_forward.1} parent=1 // pred_region
      %s21 = ssub.s32 2048, 2048
      %22 = vsyncadd [#allocation3], %s21
      %s23 = sshll.u32 [#allocation2], 4
      %s24 = int_to_ptr.vmem [resolvable:$true] %s23
      %29 = dma.hbm_to_vmem [thread:$0]  %s3, 2048, %s24, [#allocation3], 128, 128, 8
    $region17: #{net_forward.1} parent=1 // pred_fallthru
      _
    // Predicated region
    $region18: #{net_forward.1} parent=1 // pred_check
      _
    $region19: #{net_forward.1} parent=1 // pred_check_branch
      %31 = sbr.rel (0) target = $region21
    $region20: #{net_forward.1} parent=1 // pred_region
      _
    $region21: #{net_forward.1} parent=1 // pred_fallthru
      _
    // Predicated region
    $region22: #{net_forward.1} parent=1 // pred_check
      _
    $region23: #{net_forward.1} parent=1 // pred_check_branch
      %33 = sbr.rel (0) target = $region25
    $region24: #{net_forward.1} parent=1 // pred_region
      %34 = dma.done [#allocation3], 2048
    $region25: #{net_forward.1} parent=1 // pred_fallthru
      _
    %v35 = vld [vmem:[%s0] sm:$0xff]
    %v36 = vld [vmem:[%s1] sm:$0xff]
    %v37 = vld [vmem:[%s2] sm:$0x1]
    %v39 = vlaneseq
    %v40 = vshrl.u32 %v39, 7
    %v41 = vsub.s32 0, %v40
    %v42 = vrot.slane %v37, %v41
    %vm44 = vcmask 64512
    %v46 = vsel %vm44, %v35, 0
    %48 = vmatprep.subr.mxu0 0.0
    %49 = vmatpush1.msra.mxu0 %v36
    %50 = vmatprep.subr.mxu0 0.0
    %51 = vmatpush1.msra.mxu0 0.0
    %52 = vmatprep.subr.mxu0 0.0
    %53 = vmatpush1.msra.mxu0 0.0
    %54 = vmatprep.subr.mxu0 0.0
    %55 = vmatpush1.msra.mxu0 0.0
    %56 = vmatprep.subr.mxu0 0.0
    %57 = vmatpush1.msra.mxu0 0.0
    %58 = vmatprep.subr.mxu0 0.0
    %59 = vmatpush1.msra.mxu0 0.0
    %60 = vmatprep.subr.mxu0 0.0
    %61 = vmatpush1.msra.mxu0 0.0
    %62 = vmatprep.subr.mxu0 0.0
    %63 = vmatpush1.msra.mxu0 0.0
    %64 = vmatprep.subr.mxu0 0.0
    %65 = vmatpush1.msra.mxu0 0.0
    %66 = vmatprep.subr.mxu0 0.0
    %67 = vmatpush1.msra.mxu0 0.0
    %68 = vmatprep.subr.mxu0 0.0
    %69 = vmatpush1.msra.mxu0 0.0
    %70 = vmatprep.subr.mxu0 0.0
    %71 = vmatpush1.msra.mxu0 0.0
    %72 = vmatprep.subr.mxu0 0.0
    %73 = vmatpush1.msra.mxu0 0.0
    %74 = vmatprep.subr.mxu0 0.0
    %75 = vmatpush1.msra.mxu0 0.0
    %76 = vmatprep.subr.mxu0 0.0
    %77 = vmatpush1.msra.mxu0 0.0
    %78 = vmatprep.subr.mxu0 0.0
    %79 = vmatpush1.msra.mxu0 0.0
    %80 = vmatprep.subr.mxu0 0.0
    %81 = vmatpush1.msra.mxu0 0.0
    %82 = vmatprep.subr.mxu0 0.0
    %83 = vmatpush1.msra.mxu0 0.0
    %84 = vmatprep.subr.mxu0 0.0
    %85 = vmatpush1.msra.mxu0 0.0
    %86 = vmatprep.subr.mxu0 0.0
    %87 = vmatpush1.msra.mxu0 0.0
    %88 = vmatprep.subr.mxu0 0.0
    %89 = vmatpush1.msra.mxu0 0.0
    %90 = vmatprep.subr.mxu0 0.0
    %91 = vmatpush1.msra.mxu0 0.0
    %92 = vmatprep.subr.mxu0 0.0
    %93 = vmatpush1.msra.mxu0 0.0
    %94 = vmatprep.subr.mxu0 0.0
    %95 = vmatpush1.msra.mxu0 0.0
    %96 = vmatprep.subr.mxu0 0.0
    %97 = vmatpush1.msra.mxu0 0.0
    %98 = vmatprep.subr.mxu0 0.0
    %99 = vmatpush1.msra.mxu0 0.0
    %100 = vmatprep.subr.mxu0 0.0
    %101 = vmatpush1.msra.mxu0 0.0
    %102 = vmatprep.subr.mxu0 0.0
    %103 = vmatpush1.msra.mxu0 0.0
    %104 = vmatprep.subr.mxu0 0.0
    %105 = vmatpush1.msra.mxu0 0.0
    %106 = vmatprep.subr.mxu0 0.0
    %107 = vmatpush1.msra.mxu0 0.0
    %108 = vmatprep.subr.mxu0 0.0
    %109 = vmatpush1.msra.mxu0 0.0
    %110 = vmatprep.subr.mxu0 0.0
    %111 = vmatpush1.msra.mxu0 0.0
    %112 = vmatprep.mubr.f32.mxu0 0.0
    %113 = vmatmul.mubr.f32.gmra.mrb[0].mxu0 %v46
    %v114 = vpop.f32.mrb[0].mxu0
    %v115 = vadd.f32 %v42, %v114
    %v116 = vpop.f32.mrb[0].mxu0
    %117 = vdwg.mxu0
    %v118 = vmax.f32 %v115, 0.0
    %v119 = vld [vmem:[#allocation2] sm:$0xff]
    %v120 = vld [vmem:[#allocation2 + $0x8] sm:$0xff]
    %v121 = vld [vmem:[#allocation2 + $0x10] sm:$0xff]
    %v122 = vld [vmem:[#allocation2 + $0x18] sm:$0xff]
    %v123 = vld [vmem:[#allocation2 + $0x20] sm:$0xff]
    %v124 = vld [vmem:[#allocation2 + $0x28] sm:$0xff]
    %v125 = vld [vmem:[#allocation2 + $0x30] sm:$0xff]
    %v126 = vld [vmem:[#allocation2 + $0x38] sm:$0xff]
    %v127 = vld [vmem:[#allocation2 + $0x40] sm:$0xff]
    %v128 = vld [vmem:[#allocation2 + $0x48] sm:$0xff]
    %v129 = vld [vmem:[#allocation2 + $0x50] sm:$0xff]
    %v130 = vld [vmem:[#allocation2 + $0x58] sm:$0xff]
    %v131 = vld [vmem:[#allocation2 + $0x60] sm:$0xff]
    %v132 = vld [vmem:[#allocation2 + $0x68] sm:$0xff]
    %v133 = vld [vmem:[#allocation2 + $0x70] sm:$0xff]
    %v134 = vld [vmem:[#allocation2 + $0x78] sm:$0xff]
    %v135 = vld [vmem:[%s4] sm:$0x1]
    %v137 = vlaneseq
    %v138 = vshrl.u32 %v137, 7
    %v139 = vsub.s32 0, %v138
    %v140 = vrot.slane %v135, %v139
    %142 = vmatprep.subr.mxu0 0.0
    %143 = vmatpush1.msra.mxu0 %v119
    %144 = vmatprep.subr.mxu0 0.0
    %145 = vmatpush1.msra.mxu0 %v120
    %146 = vmatprep.subr.mxu0 0.0
    %147 = vmatpush1.msra.mxu0 %v121
    %148 = vmatprep.subr.mxu0 0.0
    %149 = vmatpush1.msra.mxu0 %v122
    %150 = vmatprep.subr.mxu0 0.0
    %151 = vmatpush1.msra.mxu0 %v123
    %152 = vmatprep.subr.mxu0 0.0
    %153 = vmatpush1.msra.mxu0 %v124
    %154 = vmatprep.subr.mxu0 0.0
    %155 = vmatpush1.msra.mxu0 %v125
    %156 = vmatprep.subr.mxu0 0.0
    %157 = vmatpush1.msra.mxu0 %v126
    %158 = vmatprep.subr.mxu0 0.0
    %159 = vmatpush1.msra.mxu0 %v127
    %160 = vmatprep.subr.mxu0 0.0
    %161 = vmatpush1.msra.mxu0 %v128
    %162 = vmatprep.subr.mxu0 0.0
    %163 = vmatpush1.msra.mxu0 %v129
    %164 = vmatprep.subr.mxu0 0.0
    %165 = vmatpush1.msra.mxu0 %v130
    %166 = vmatprep.subr.mxu0 0.0
    %167 = vmatpush1.msra.mxu0 %v131
    %168 = vmatprep.subr.mxu0 0.0
    %169 = vmatpush1.msra.mxu0 %v132
    %170 = vmatprep.subr.mxu0 0.0
    %171 = vmatpush1.msra.mxu0 %v133
    %172 = vmatprep.subr.mxu0 0.0
    %173 = vmatpush1.msra.mxu0 %v134
    %174 = vmatprep.subr.mxu0 0.0
    %175 = vmatpush1.msra.mxu0 0.0
    %176 = vmatprep.subr.mxu0 0.0
    %177 = vmatpush1.msra.mxu0 0.0
    %178 = vmatprep.subr.mxu0 0.0
    %179 = vmatpush1.msra.mxu0 0.0
    %180 = vmatprep.subr.mxu0 0.0
    %181 = vmatpush1.msra.mxu0 0.0
    %182 = vmatprep.subr.mxu0 0.0
    %183 = vmatpush1.msra.mxu0 0.0
    %184 = vmatprep.subr.mxu0 0.0
    %185 = vmatpush1.msra.mxu0 0.0
    %186 = vmatprep.subr.mxu0 0.0
    %187 = vmatpush1.msra.mxu0 0.0
    %188 = vmatprep.subr.mxu0 0.0
    %189 = vmatpush1.msra.mxu0 0.0
    %190 = vmatprep.subr.mxu0 0.0
    %191 = vmatpush1.msra.mxu0 0.0
    %192 = vmatprep.subr.mxu0 0.0
    %193 = vmatpush1.msra.mxu0 0.0
    %194 = vmatprep.subr.mxu0 0.0
    %195 = vmatpush1.msra.mxu0 0.0
    %196 = vmatprep.subr.mxu0 0.0
    %197 = vmatpush1.msra.mxu0 0.0
    %198 = vmatprep.subr.mxu0 0.0
    %199 = vmatpush1.msra.mxu0 0.0
    %200 = vmatprep.subr.mxu0 0.0
    %201 = vmatpush1.msra.mxu0 0.0
    %202 = vmatprep.subr.mxu0 0.0
    %203 = vmatpush1.msra.mxu0 0.0
    %204 = vmatprep.subr.mxu0 0.0
    %205 = vmatpush1.msra.mxu0 0.0
    %206 = vmatprep.mubr.f32.mxu0 0.0
    %207 = vmatmul.mubr.f32.gmra.mrb[0].mxu0 %v118
    %v208 = vpop.f32.mrb[0].mxu0
    %v209 = vadd.f32 %v140, %v208
    %v210 = vpop.f32.mrb[0].mxu0
    %211 = vdwg.mxu0
    %212 = vmax.xlane.f32.xlu0 %v209
    %v213 = vpop.xlane.xlu0 %212
    %v214 = vsub.f32 %v209, %v213
    %v215 = vmul.f32 %v214, 1.442695
    %v216 = vpow.pop %v215
    %217 = vadd.xlane.f32.xlu0 %v216
    %v218 = vpop.xlane.xlu0 %217
    %v219 = vrcp.pop %v218
    %v220 = vmul.f32 %v216, %v219
    %221 = vst.msk [vmem:[#allocation5] sm:$0xff] %vm44, %v220
    // Predicated region
    $region26: #{net_forward.1} parent=1 // pred_check
      _
    $region27: #{net_forward.1} parent=1 // pred_check_branch
      %223 = sbr.rel (0) target = $region29
    $region28: #{net_forward.1} parent=1 // pred_region
      %s225 = ssub.s32 128, 32
      %226 = vsyncadd [#allocation4], %s225
      %s227 = sshll.u32 [#allocation5], 4
      %s228 = int_to_ptr.vmem [resolvable:$true] %s227
      %233 = dma.vmem_to_hbm [thread:$0]  %s228, 32, %s5, [#allocation4], 32, 32, 2
    $region29: #{net_forward.1} parent=1 // pred_fallthru
      _
    // Predicated region
    $region30: #{net_forward.1} parent=1 // pred_check
      _
    $region31: #{net_forward.1} parent=1 // pred_check_branch
      %235 = sbr.rel (0) target = $region33
    $region32: #{net_forward.1} parent=1 // pred_region
      %236 = dma.done [#allocation4], 128
    $region33: #{net_forward.1} parent=1 // pred_fallthru
      _
    %237 = vsyncpa [#allocation3], 1
    %238 = vsyncpa [#allocation4], 1

</llo_original>
